<compile_context>
chip_gen: v7x
topology: tpu7x:2x2x1
jax: 0.10.0
libtpu: 0.0.40
codegen_flags: <defaults>
</compile_context>

<pallas_src>
import functools

import jax
import jax.numpy as jnp
from jax.experimental import pallas as pl
from jax.experimental.pallas import tpu as pltpu


# --------------------------------------------------------------------------
# Kernel A: SE path + gating (runs once, no grid).
# --------------------------------------------------------------------------
def _se_gate_kernel(x_se_ref, w1_ref, b1_ref, w2_ref, b2_ref, x_ref, xs_ref):
    x_se = x_se_ref[...].astype(w1_ref.dtype)                          # [C, 1]
    h = jnp.dot(w1_ref[...], x_se,
                preferred_element_type=jnp.float32) + b1_ref[...]      # [Cr, 1]
    h = jnp.maximum(h, 0.0)                                            # ReLU
    s = jnp.dot(w2_ref[...], h.astype(w2_ref.dtype),
                preferred_element_type=jnp.float32) + b2_ref[...]      # [C, 1]
    s = jax.nn.sigmoid(s)
    # Gate the full feature map; store in the matmul compute dtype.
    xs_ref[...] = (s * x_ref[...].astype(jnp.float32)).astype(xs_ref.dtype)


# --------------------------------------------------------------------------
# Kernel B: conv2d94 (1x1, no bias) output-channel tile + BatchNorm2d.
# --------------------------------------------------------------------------
def _conv_bn_kernel(xs_ref, w3_ref, gamma_ref, beta_ref, o_ref, *, eps):
    z = jnp.dot(w3_ref[...], xs_ref[...],
                preferred_element_type=jnp.float32)                    # [TC, HW]
    # Training-mode BatchNorm: biased batch stats over H*W (N=1), computed with
    # the centered two-pass form for better numerics (z is already in vregs).
    mean = jnp.mean(z, axis=1, keepdims=True)                          # [TC, 1]
    zc = z - mean
    var = jnp.mean(zc * zc, axis=1, keepdims=True)
    inv_std = jax.lax.rsqrt(var + eps)
    o_ref[...] = (zc * (inv_std * gamma_ref[...])
                  + beta_ref[...]).astype(o_ref.dtype)


def _pick_cout_tile(c, max_tile=1024):
    """Largest multiple-of-8 divisor of `c` <= max_tile, preferring an even
    number of grid steps (balanced megacore split on v7x)."""
    if c <= max_tile:
        return c
    candidates = [t for t in range(8, max_tile + 1, 8) if c % t == 0]
    if not candidates:
        return c
    even = [t for t in candidates if (c // t) % 2 == 0]
    return max(even) if even else max(candidates)


def _padded_vmem_bytes(shape, dtype):
    """Bytes of one VMEM buffer for a 2-D block, padded to (8, 128) tiles."""
    rows, cols = shape
    rows_p = ((rows + 7) // 8) * 8
    cols_p = ((cols + 127) // 128) * 128
    return rows_p * cols_p * jnp.dtype(dtype).itemsize


def se_conv_bn(x290, x289, w1, b1, w2, b2, w3, gamma, beta, eps=1e-5,
               *, tc_out=None, weight_dtype=jnp.bfloat16):
    """x290: [1, C, 1, 1] (squeezed features),  x289: [1, C, H, W]."""
    N, C, H, W = x289.shape
    assert N == 1, "kernel is written for batch size 1 (as in the reference)"
    Cr = w1.shape[0]
    HW = H * W

    if tc_out is None:
        tc_out = _pick_cout_tile(C)            # e.g. 504 for C=3024 (6 steps)
    assert C % tc_out == 0
    assert tc_out % 8 == 0 or tc_out == C

    compute_dtype = weight_dtype               # dtype of w3 / gated activations

    x_se = x290.reshape(C, 1).astype(jnp.float32)
    x = x289.reshape(C, HW).astype(compute_dtype)
    w1m = w1.reshape(Cr, C).astype(compute_dtype)     # SE weights streamed once
    w2m = w2.reshape(C, Cr).astype(compute_dtype)
    b1c = b1.reshape(Cr, 1).astype(jnp.float32)
    b2c = b2.reshape(C, 1).astype(jnp.float32)
    w3m = w3.reshape(C, C).astype(weight_dtype)       # dominant stream
    gammac = gamma.reshape(C, 1).astype(jnp.float32)
    betac = beta.reshape(C, 1).astype(jnp.float32)
    out_dtype = x289.dtype

    # ---- Kernel A: SE GEMVs + sigmoid + gating, single invocation ----------
    xs = pl.pallas_call(
        _se_gate_kernel,
        out_shape=jax.ShapeDtypeStruct((C, HW), compute_dtype),
        compiler_params=pltpu.CompilerParams(
            vmem_limit_bytes=40 * 1024 * 1024,
        ),
    )(x_se, w1m, b1c, w2m, b2c, x)

    # ---- Kernel B: output-channel-tiled matmul + BatchNorm ----------------
    # VMEM estimate: double-buffered w3 tile + const xs + output tile + BN
    # params, with (8, 128) padding.  Cap at 48 MiB (headroom on v7x's 64 MiB).
    est = 2 * (_padded_vmem_bytes((tc_out, C), weight_dtype)
               + _padded_vmem_bytes((C, HW), compute_dtype)
               + _padded_vmem_bytes((tc_out, HW), out_dtype)
               + 2 * _padded_vmem_bytes((tc_out, 1), jnp.float32))
    vmem_limit = int(max(min(est + 16 * 1024 * 1024, 48 * 1024 * 1024),
                         est + 2 * 1024 * 1024))

    out = pl.pallas_call(
        functools.partial(_conv_bn_kernel, eps=eps),
        out_shape=jax.ShapeDtypeStruct((C, HW), out_dtype),
        grid_spec=pltpu.PrefetchScalarGridSpec(
            num_scalar_prefetch=0,
            grid=(C // tc_out,),
            in_specs=[
                pl.BlockSpec((C, HW), lambda i: (0, 0)),          # gated xs (const)
                pl.BlockSpec((tc_out, C), lambda i: (i, 0)),      # w3 row tile
                pl.BlockSpec((tc_out, 1), lambda i: (i, 0)),      # gamma tile
                pl.BlockSpec((tc_out, 1), lambda i: (i, 0)),      # beta tile
            ],
            out_specs=pl.BlockSpec((tc_out, HW), lambda i: (i, 0)),
        ),
        compiler_params=pltpu.CompilerParams(
            # Tiles are fully independent now -> megacore sharding on v7x.
            dimension_semantics=("parallel",),
            vmem_limit_bytes=vmem_limit,
        ),
    )(xs, w3m, gammac, betac)
    return out.reshape(1, C, H, W)


def _reference(x290, x289, w1, b1, w2, b2, w3, gamma, beta, eps=1e-5):
    N, C, H, W = x289.shape
    Cr = w1.shape[0]
    x_se = x290.reshape(C, 1)
    h = jnp.maximum(w1.reshape(Cr, C) @ x_se + b1.reshape(Cr, 1), 0.0)
    s = jax.nn.sigmoid(w2.reshape(C, Cr) @ h + b2.reshape(C, 1))
    x_scaled = s * x289.reshape(C, H * W)
    z = w3.reshape(C, C) @ x_scaled
    mean = jnp.mean(z, axis=1, keepdims=True)
    var = jnp.mean((z - mean) ** 2, axis=1, keepdims=True)
    y = (z - mean) * jax.lax.rsqrt(var + eps) * gamma.reshape(C, 1) + beta.reshape(C, 1)
    return y.reshape(1, C, H, W)


if __name__ == "__main__":
    # Small shapes consistent with the module structure
    # (original: C=3024, Cr=308, H=W=7; here scaled down).
    C, Cr, H, W = 64, 16, 8, 8

    key = jax.random.PRNGKey(0)
    k = jax.random.split(key, 9)
    x289 = jax.random.normal(k[0], (1, C, H, W), jnp.float32)   # full feature map
    x290 = jax.random.normal(k[1], (1, C, 1, 1), jnp.float32)   # squeezed features

    # Deterministic parameter init (conv weights in PyTorch OIHW layout, 1x1).
    w1 = jax.random.normal(k[2], (Cr, C, 1, 1), jnp.float32) * 0.05   # conv2d92
    b1 = jax.random.normal(k[3], (Cr,), jnp.float32) * 0.05
    w2 = jax.random.normal(k[4], (C, Cr, 1, 1), jnp.float32) * 0.05   # conv2d93
    b2 = jax.random.normal(k[5], (C,), jnp.float32) * 0.05
    w3 = jax.random.normal(k[6], (C, C, 1, 1), jnp.float32) * 0.05    # conv2d94 (no bias)
    gamma = jnp.ones((C,), jnp.float32)                               # BN weight
    beta = jnp.zeros((C,), jnp.float32)                               # BN bias

    ref = _reference(x290, x289, w1, b1, w2, b2, w3, gamma, beta)

    # f32 everywhere, multi-tile grid: should match the reference tightly.
    out_f32 = se_conv_bn(x290, x289, w1, b1, w2, b2, w3, gamma, beta,
                         tc_out=32, weight_dtype=jnp.float32)
    out_f32 = jax.block_until_ready(out_f32)
    assert out_f32.shape == (1, C, H, W)
    assert jnp.allclose(out_f32, ref, atol=1e-4, rtol=1e-4)

    # Default path: bf16 weights + gated activations, f32 accumulation,
    # multi-tile grid exercising the pipelined weight stream.
    out_bf16 = se_conv_bn(x290, x289, w1, b1, w2, b2, w3, gamma, beta,
                          tc_out=16)
    out_bf16 = jax.block_until_ready(out_bf16)
    assert out_bf16.shape == (1, C, H, W)
    assert jnp.allclose(out_bf16, ref, atol=5e-2, rtol=5e-2)

    print("KERNEL_OK")
</pallas_src>

<mosaic_0001>
module attributes {stable_mosaic.version = 11 : i64} {
  func.func @_se_gate_kernel(%arg0: memref<64x1xf32, #tpu.memory_space<vmem>>, %arg1: memref<16x64xf32, #tpu.memory_space<vmem>>, %arg2: memref<16x1xf32, #tpu.memory_space<vmem>>, %arg3: memref<64x16xf32, #tpu.memory_space<vmem>>, %arg4: memref<64x1xf32, #tpu.memory_space<vmem>>, %arg5: memref<64x64xf32, #tpu.memory_space<vmem>>, %arg6: memref<64x64xf32, #tpu.memory_space<vmem>>) attributes {dimension_semantics = [], scalar_prefetch = 0 : i64, scratch_operands = 0 : i64, tpu.core_type = #tpu.core_type<tc>} {
    %c0 = arith.constant 0 : index
    %c0_0 = arith.constant 0 : index
    %0 = vector.load %arg0[%c0, %c0_0] : memref<64x1xf32, #tpu.memory_space<vmem>>, vector<64x1xf32>
    %c0_1 = arith.constant 0 : index
    %c0_2 = arith.constant 0 : index
    %1 = vector.load %arg1[%c0_1, %c0_2] : memref<16x64xf32, #tpu.memory_space<vmem>>, vector<16x64xf32>
    %cst = arith.constant dense<0.000000e+00> : vector<16x1xf32>
    %2 = tpu.matmul %1, %0, %cst {dimension_numbers = #tpu.dot_dimension_numbers<[1], [0], [0], [1], [0, 0, 1, 1], [], []>} : vector<16x64xf32>, vector<64x1xf32>, vector<16x1xf32> -> vector<16x1xf32>
    %c0_3 = arith.constant 0 : index
    %c0_4 = arith.constant 0 : index
    %3 = vector.load %arg2[%c0_3, %c0_4] : memref<16x1xf32, #tpu.memory_space<vmem>>, vector<16x1xf32>
    %4 = arith.addf %2, %3 : vector<16x1xf32>
    %cst_5 = arith.constant 0.000000e+00 : f32
    %5 = vector.broadcast %cst_5 : f32 to vector<16x1xf32>
    %6 = arith.maximumf %4, %5 : vector<16x1xf32>
    %c0_6 = arith.constant 0 : index
    %c0_7 = arith.constant 0 : index
    %7 = vector.load %arg3[%c0_6, %c0_7] : memref<64x16xf32, #tpu.memory_space<vmem>>, vector<64x16xf32>
    %cst_8 = arith.constant dense<0.000000e+00> : vector<64x1xf32>
    %8 = tpu.matmul %7, %6, %cst_8 {dimension_numbers = #tpu.dot_dimension_numbers<[1], [0], [0], [1], [0, 0, 1, 1], [], []>} : vector<64x16xf32>, vector<16x1xf32>, vector<64x1xf32> -> vector<64x1xf32>
    %c0_9 = arith.constant 0 : index
    %c0_10 = arith.constant 0 : index
    %9 = vector.load %arg4[%c0_9, %c0_10] : memref<64x1xf32, #tpu.memory_space<vmem>>, vector<64x1xf32>
    %10 = arith.addf %8, %9 : vector<64x1xf32>
    %11 = arith.negf %10 : vector<64x1xf32>
    %12 = math.exp %11 : vector<64x1xf32>
    %cst_11 = arith.constant 1.000000e+00 : f32
    %13 = vector.broadcast %cst_11 : f32 to vector<64x1xf32>
    %14 = arith.addf %13, %12 : vector<64x1xf32>
    %15 = arith.divf %13, %14 : vector<64x1xf32>
    %c0_12 = arith.constant 0 : index
    %c0_13 = arith.constant 0 : index
    %16 = vector.load %arg5[%c0_12, %c0_13] : memref<64x64xf32, #tpu.memory_space<vmem>>, vector<64x64xf32>
    %17 = vector.broadcast %15 : vector<64x1xf32> to vector<64x64xf32>
    %18 = arith.mulf %17, %16 : vector<64x64xf32>
    %c0_14 = arith.constant 0 : index
    %c0_15 = arith.constant 0 : index
    %19 = vector.load %arg6[%c0_14, %c0_15] : memref<64x64xf32, #tpu.memory_space<vmem>>, vector<64x64xf32>
    tpu.vector_store %arg6[%c0_14, %c0_15], %18 {strides = array<i32>} : memref<64x64xf32, #tpu.memory_space<vmem>>, vector<64x64xf32>,
    return
  }
}

</mosaic_0001>

<llo_original>
// kernel: tpu_custom_call.1
$region0: #{tpu_custom_call.1}
  #allocation0 [shape = 'u32[]', space=smem, size = 0x4, offset = 0x4, fixed_abs, tag = 'smem constant byte address 0x4 - core index']
  #allocation1 [shape = 'u32[144,128]{1,0:T(1,128)}', space=vmem, size = 0x12000, scoped, tag = 'internal scratch']
  %s0 = inlined_call_operand.vmem [shape: f32[64,1], index: 0, kind: input, shape index: {}]
  %s1 = inlined_call_operand.vmem [shape: f32[16,64], index: 1, kind: input, shape index: {}]
  %s2 = inlined_call_operand.vmem [shape: f32[16,1], index: 2, kind: input, shape index: {}]
  %s3 = inlined_call_operand.vmem [shape: f32[64,16], index: 3, kind: input, shape index: {}]
  %s4 = inlined_call_operand.vmem [shape: f32[64,1], index: 4, kind: input, shape index: {}]
  %s5 = inlined_call_operand.vmem [shape: f32[64,64], index: 5, kind: input, shape index: {}]
  %s6 = inlined_call_operand.hbm [shape: f32[64,64], index: 6, kind: output, shape index: {}]
  %s7 = sld [smem:[#allocation0]]
  $region34: #{tpu_custom_call.1} parent=0
    _
  %s9 = ssub.s32 1, %s7
  %s10 = scalar_select 0, %s9, %s7
  $region1: #{tpu_custom_call.1} parent=0
    #allocation2 [shape = 'u8[32768]{0}', space=vmem, size = 0x8000, scoped, tag = 'output window, operand 0, single buffered']
    #allocation3 [shape = 's32[1]{0}', space=sflag, size = 0x4, scoped, tag = 'scoped memory for tpu_custom_call.1']
    %11 = vsyncpa [#allocation3], 0
    // Predicated region
    $region2: #{tpu_custom_call.1} parent=1 // pred_check
      _
    $region3: #{tpu_custom_call.1} parent=1 // pred_check_branch
      %13 = sbr.rel (0) target = $region5
    $region4: #{tpu_custom_call.1} parent=1 // pred_region
      _
    $region5: #{tpu_custom_call.1} parent=1 // pred_fallthru
      _
    // Predicated region
    $region6: #{tpu_custom_call.1} parent=1 // pred_check
      _
    $region7: #{tpu_custom_call.1} parent=1 // pred_check_branch
      %15 = sbr.rel (0) target = $region9
    $region8: #{tpu_custom_call.1} parent=1 // pred_region
      _
    $region9: #{tpu_custom_call.1} parent=1 // pred_fallthru
      _
    // Predicated region
    $region10: #{tpu_custom_call.1} parent=1 // pred_check
      _
    $region11: #{tpu_custom_call.1} parent=1 // pred_check_branch
      %17 = sbr.rel (0) target = $region13
    $region12: #{tpu_custom_call.1} parent=1 // pred_region
      _
    $region13: #{tpu_custom_call.1} parent=1 // pred_fallthru
      _
    // Predicated region
    $region14: #{tpu_custom_call.1} parent=1 // pred_check
      _
    $region15: #{tpu_custom_call.1} parent=1 // pred_check_branch
      %19 = sbr.rel (0) target = $region17
    $region16: #{tpu_custom_call.1} parent=1 // pred_region
      _
    $region17: #{tpu_custom_call.1} parent=1 // pred_fallthru
      _
    // Predicated region
    $region18: #{tpu_custom_call.1} parent=1 // pred_check
      _
    $region19: #{tpu_custom_call.1} parent=1 // pred_check_branch
      %21 = sbr.rel (0) target = $region21
    $region20: #{tpu_custom_call.1} parent=1 // pred_region
      _
    $region21: #{tpu_custom_call.1} parent=1 // pred_fallthru
      _
    // Predicated region
    $region22: #{tpu_custom_call.1} parent=1 // pred_check
      _
    $region23: #{tpu_custom_call.1} parent=1 // pred_check_branch
      %23 = sbr.rel (0) target = $region25
    $region24: #{tpu_custom_call.1} parent=1 // pred_region
      _
    $region25: #{tpu_custom_call.1} parent=1 // pred_fallthru
      _
    %v24 = vld [vmem:[%s0] sm:$0xff]
    %v25 = vld [vmem:[%s0 + $0x8] sm:$0xff]
    %v26 = vld [vmem:[%s0 + $0x10] sm:$0xff]
    %v27 = vld [vmem:[%s0 + $0x18] sm:$0xff]
    %v28 = vld [vmem:[%s0 + $0x20] sm:$0xff]
    %v29 = vld [vmem:[%s0 + $0x28] sm:$0xff]
    %v30 = vld [vmem:[%s0 + $0x30] sm:$0xff]
    %v31 = vld [vmem:[%s0 + $0x38] sm:$0xff]
    %v32 = vld [vmem:[%s1] sm:$0xff]
    %v33 = vld [vmem:[%s1 + $0x8] sm:$0xff]
    %v34 = vld [vmem:[%s2] sm:$0xff]
    %v35 = vld [vmem:[%s2 + $0x8] sm:$0xff]
    %vm36 = vcmask 523264
    %v38 = vsel %vm36, %v32, 0
    %v41 = vsel %vm36, %v33, 0
    %43 = vmatprep.subr.mxu0 0.0
    %44 = vmatpush1.msra.mxu0 %v24
    %45 = vmatprep.subr.mxu0 0.0
    %46 = vmatpush1.msra.mxu0 %v25
    %47 = vmatprep.subr.mxu0 0.0
    %48 = vmatpush1.msra.mxu0 %v26
    %49 = vmatprep.subr.mxu0 0.0
    %50 = vmatpush1.msra.mxu0 %v27
    %51 = vmatprep.subr.mxu0 0.0
    %52 = vmatpush1.msra.mxu0 %v28
    %53 = vmatprep.subr.mxu0 0.0
    %54 = vmatpush1.msra.mxu0 %v29
    %55 = vmatprep.subr.mxu0 0.0
    %56 = vmatpush1.msra.mxu0 %v30
    %57 = vmatprep.subr.mxu0 0.0
    %58 = vmatpush1.msra.mxu0 %v31
    %59 = vmatprep.subr.mxu0 0.0
    %60 = vmatpush1.msra.mxu0 0.0
    %61 = vmatprep.subr.mxu0 0.0
    %62 = vmatpush1.msra.mxu0 0.0
    %63 = vmatprep.subr.mxu0 0.0
    %64 = vmatpush1.msra.mxu0 0.0
    %65 = vmatprep.subr.mxu0 0.0
    %66 = vmatpush1.msra.mxu0 0.0
    %67 = vmatprep.subr.mxu0 0.0
    %68 = vmatpush1.msra.mxu0 0.0
    %69 = vmatprep.subr.mxu0 0.0
    %70 = vmatpush1.msra.mxu0 0.0
    %71 = vmatprep.subr.mxu0 0.0
    %72 = vmatpush1.msra.mxu0 0.0
    %73 = vmatprep.subr.mxu0 0.0
    %74 = vmatpush1.msra.mxu0 0.0
    %75 = vmatprep.subr.mxu0 0.0
    %76 = vmatpush1.msra.mxu0 0.0
    %77 = vmatprep.subr.mxu0 0.0
    %78 = vmatpush1.msra.mxu0 0.0
    %79 = vmatprep.subr.mxu0 0.0
    %80 = vmatpush1.msra.mxu0 0.0
    %81 = vmatprep.subr.mxu0 0.0
    %82 = vmatpush1.msra.mxu0 0.0
    %83 = vmatprep.subr.mxu0 0.0
    %84 = vmatpush1.msra.mxu0 0.0
    %85 = vmatprep.subr.mxu0 0.0
    %86 = vmatpush1.msra.mxu0 0.0
    %87 = vmatprep.subr.mxu0 0.0
    %88 = vmatpush1.msra.mxu0 0.0
    %89 = vmatprep.subr.mxu0 0.0
    %90 = vmatpush1.msra.mxu0 0.0
    %91 = vmatprep.subr.mxu0 0.0
    %92 = vmatpush1.msra.mxu0 0.0
    %93 = vmatprep.subr.mxu0 0.0
    %94 = vmatpush1.msra.mxu0 0.0
    %95 = vmatprep.subr.mxu0 0.0
    %96 = vmatpush1.msra.mxu0 0.0
    %97 = vmatprep.subr.mxu0 0.0
    %98 = vmatpush1.msra.mxu0 0.0
    %99 = vmatprep.subr.mxu0 0.0
    %100 = vmatpush1.msra.mxu0 0.0
    %101 = vmatprep.subr.mxu0 0.0
    %102 = vmatpush1.msra.mxu0 0.0
    %103 = vmatprep.subr.mxu0 0.0
    %104 = vmatpush1.msra.mxu0 0.0
    %105 = vmatprep.subr.mxu0 0.0
    %106 = vmatpush1.msra.mxu0 0.0
    %107 = vmatprep.mubr.f32.mxu0 0.0
    %108 = vmatmul.mubr.f32.gmra.mrb[0].mxu0 %v38
    %v109 = vpop.f32.mrb[0].mxu0
    %v110 = vadd.f32 %v34, %v109
    %v111 = vpop.f32.mrb[0].mxu0
    %112 = vmatprep.mubr.f32.mxu0 0.0
    %113 = vmatmul.mubr.f32.gmra.mrb[0].mxu0 %v41
    %v114 = vpop.f32.mrb[0].mxu0
    %v115 = vadd.f32 %v35, %v114
    %v116 = vpop.f32.mrb[0].mxu0
    %117 = vdwg.mxu0
    %v118 = vmax.f32 %v110, 0.0
    %v119 = vmax.f32 %v115, 0.0
    %v120 = vld [vmem:[%s3] sm:$0xff]
    %v121 = vld [vmem:[%s3 + $0x8] sm:$0xff]
    %v122 = vld [vmem:[%s3 + $0x10] sm:$0xff]
    %v123 = vld [vmem:[%s3 + $0x18] sm:$0xff]
    %v124 = vld [vmem:[%s3 + $0x20] sm:$0xff]
    %v125 = vld [vmem:[%s3 + $0x28] sm:$0xff]
    %v126 = vld [vmem:[%s3 + $0x30] sm:$0xff]
    %v127 = vld [vmem:[%s3 + $0x38] sm:$0xff]
    %v128 = vld [vmem:[%s4] sm:$0xff]
    %v129 = vld [vmem:[%s4 + $0x8] sm:$0xff]
    %v130 = vld [vmem:[%s4 + $0x10] sm:$0xff]
    %v131 = vld [vmem:[%s4 + $0x18] sm:$0xff]
    %v132 = vld [vmem:[%s4 + $0x20] sm:$0xff]
    %v133 = vld [vmem:[%s4 + $0x28] sm:$0xff]
    %v134 = vld [vmem:[%s4 + $0x30] sm:$0xff]
    %v135 = vld [vmem:[%s4 + $0x38] sm:$0xff]
    %vm136 = vcmask 130048
    %v138 = vsel %vm136, %v120, 0
    %v141 = vsel %vm136, %v121, 0
    %v144 = vsel %vm136, %v122, 0
    %v147 = vsel %vm136, %v123, 0
    %v150 = vsel %vm136, %v124, 0
    %v153 = vsel %vm136, %v125, 0
    %v156 = vsel %vm136, %v126, 0
    %v159 = vsel %vm136, %v127, 0
    %161 = vmatprep.subr.mxu0 0.0
    %162 = vmatpush1.msra.mxu0 %v118
    %163 = vmatprep.subr.mxu0 0.0
    %164 = vmatpush1.msra.mxu0 %v119
    %165 = vmatprep.subr.mxu0 0.0
    %166 = vmatpush1.msra.mxu0 0.0
    %167 = vmatprep.subr.mxu0 0.0
    %168 = vmatpush1.msra.mxu0 0.0
    %169 = vmatprep.subr.mxu0 0.0
    %170 = vmatpush1.msra.mxu0 0.0
    %171 = vmatprep.subr.mxu0 0.0
    %172 = vmatpush1.msra.mxu0 0.0
    %173 = vmatprep.subr.mxu0 0.0
    %174 = vmatpush1.msra.mxu0 0.0
    %175 = vmatprep.subr.mxu0 0.0
    %176 = vmatpush1.msra.mxu0 0.0
    %177 = vmatprep.subr.mxu0 0.0
    %178 = vmatpush1.msra.mxu0 0.0
    %179 = vmatprep.subr.mxu0 0.0
    %180 = vmatpush1.msra.mxu0 0.0
    %181 = vmatprep.subr.mxu0 0.0
    %182 = vmatpush1.msra.mxu0 0.0
    %183 = vmatprep.subr.mxu0 0.0
    %184 = vmatpush1.msra.mxu0 0.0
    %185 = vmatprep.subr.mxu0 0.0
    %186 = vmatpush1.msra.mxu0 0.0
    %187 = vmatprep.subr.mxu0 0.0
    %188 = vmatpush1.msra.mxu0 0.0
    %189 = vmatprep.subr.mxu0 0.0
    %190 = vmatpush1.msra.mxu0 0.0
    %191 = vmatprep.subr.mxu0 0.0
    %192 = vmatpush1.msra.mxu0 0.0
    %193 = vmatprep.subr.mxu0 0.0
    %194 = vmatpush1.msra.mxu0 0.0
    %195 = vmatprep.subr.mxu0 0.0
    %196 = vmatpush1.msra.mxu0 0.0
    %197 = vmatprep.subr.mxu0 0.0
    %198 = vmatpush1.msra.mxu0 0.0
    %199 = vmatprep.subr.mxu0 0.0
    %200 = vmatpush1.msra.mxu0 0.0
    %201 = vmatprep.subr.mxu0 0.0
    %202 = vmatpush1.msra.mxu0 0.0
    %203 = vmatprep.subr.mxu0 0.0
    %204 = vmatpush1.msra.mxu0 0.0
    %205 = vmatprep.subr.mxu0 0.0
    %206 = vmatpush1.msra.mxu0 0.0
    %207 = vmatprep.subr.mxu0 0.0
    %208 = vmatpush1.msra.mxu0 0.0
    %209 = vmatprep.subr.mxu0 0.0
    %210 = vmatpush1.msra.mxu0 0.0
    %211 = vmatprep.subr.mxu0 0.0
    %212 = vmatpush1.msra.mxu0 0.0
    %213 = vmatprep.subr.mxu0 0.0
    %214 = vmatpush1.msra.mxu0 0.0
    %215 = vmatprep.subr.mxu0 0.0
    %216 = vmatpush1.msra.mxu0 0.0
    %217 = vmatprep.subr.mxu0 0.0
    %218 = vmatpush1.msra.mxu0 0.0
    %219 = vmatprep.subr.mxu0 0.0
    %220 = vmatpush1.msra.mxu0 0.0
    %221 = vmatprep.subr.mxu0 0.0
    %222 = vmatpush1.msra.mxu0 0.0
    %223 = vmatprep.subr.mxu0 0.0
    %224 = vmatpush1.msra.mxu0 0.0
    %225 = vmatprep.mubr.f32.mxu0 0.0
    %226 = vmatmul.mubr.f32.gmra.mrb[0].mxu0 %v138
    %v227 = vpop.f32.mrb[0].mxu0
    %v228 = vadd.f32 %v128, %v227
    %v229 = vpop.f32.mrb[0].mxu0
    %230 = vmatprep.mubr.f32.mxu0 0.0
    %231 = vmatmul.mubr.f32.gmra.mrb[0].mxu0 %v141
    %v232 = vpop.f32.mrb[0].mxu0
    %v233 = vadd.f32 %v129, %v232
    %v234 = vpop.f32.mrb[0].mxu0
    %235 = vmatprep.mubr.f32.mxu0 0.0
    %236 = vmatmul.mubr.f32.gmra.mrb[0].mxu0 %v144
    %v237 = vpop.f32.mrb[0].mxu0
    %v238 = vadd.f32 %v130, %v237
    %v239 = vpop.f32.mrb[0].mxu0
    %240 = vmatprep.mubr.f32.mxu0 0.0
    %241 = vmatmul.mubr.f32.gmra.mrb[0].mxu0 %v147
    %v242 = vpop.f32.mrb[0].mxu0
    %v243 = vadd.f32 %v131, %v242
    %v244 = vpop.f32.mrb[0].mxu0
    %245 = vmatprep.mubr.f32.mxu0 0.0
    %246 = vmatmul.mubr.f32.gmra.mrb[0].mxu0 %v150
    %v247 = vpop.f32.mrb[0].mxu0
    %v248 = vadd.f32 %v132, %v247
    %v249 = vpop.f32.mrb[0].mxu0
    %250 = vmatprep.mubr.f32.mxu0 0.0
    %251 = vmatmul.mubr.f32.gmra.mrb[0].mxu0 %v153
    %v252 = vpop.f32.mrb[0].mxu0
    %v253 = vadd.f32 %v133, %v252
    %v254 = vpop.f32.mrb[0].mxu0
    %255 = vmatprep.mubr.f32.mxu0 0.0
    %256 = vmatmul.mubr.f32.gmra.mrb[0].mxu0 %v156
    %v257 = vpop.f32.mrb[0].mxu0
    %v258 = vadd.f32 %v134, %v257
    %v259 = vpop.f32.mrb[0].mxu0
    %260 = vmatprep.mubr.f32.mxu0 0.0
    %261 = vmatmul.mubr.f32.gmra.mrb[0].mxu0 %v159
    %v262 = vpop.f32.mrb[0].mxu0
    %v263 = vadd.f32 %v135, %v262
    %v264 = vpop.f32.mrb[0].mxu0
    %265 = vdwg.mxu0
    %v266 = vxor.u32 %v228, 2147483648
    %v267 = vxor.u32 %v233, 2147483648
    %v268 = vxor.u32 %v238, 2147483648
    %v269 = vxor.u32 %v243, 2147483648
    %v270 = vxor.u32 %v248, 2147483648
    %v271 = vxor.u32 %v253, 2147483648
    %v272 = vxor.u32 %v258, 2147483648
    %v273 = vxor.u32 %v263, 2147483648
    %v274 = vmul.f32 %v266, 1.442695
    %v275 = vpow.pop %v274
    %v276 = vmul.f32 %v267, 1.442695
    %v277 = vpow.pop %v276
    %v278 = vmul.f32 %v268, 1.442695
    %v279 = vpow.pop %v278
    %v280 = vmul.f32 %v269, 1.442695
    %v281 = vpow.pop %v280
    %v282 = vmul.f32 %v270, 1.442695
    %v283 = vpow.pop %v282
    %v284 = vmul.f32 %v271, 1.442695
    %v285 = vpow.pop %v284
    %v286 = vmul.f32 %v272, 1.442695
    %v287 = vpow.pop %v286
    %v288 = vmul.f32 %v273, 1.442695
    %v289 = vpow.pop %v288
    %v290 = vadd.f32 %v275, 1.0
    %v291 = vadd.f32 %v277, 1.0
    %v292 = vadd.f32 %v279, 1.0
    %v293 = vadd.f32 %v281, 1.0
    %v294 = vadd.f32 %v283, 1.0
    %v295 = vadd.f32 %v285, 1.0
    %v296 = vadd.f32 %v287, 1.0
    %v297 = vadd.f32 %v289, 1.0
    %v298 = vrcp.pop %v290
    %v299 = vmul.f32 1.0, %v298
    %v300 = vrcp.pop %v291
    %v301 = vmul.f32 1.0, %v300
    %v302 = vrcp.pop %v292
    %v303 = vmul.f32 1.0, %v302
    %v304 = vrcp.pop %v293
    %v305 = vmul.f32 1.0, %v304
    %v306 = vrcp.pop %v294
    %v307 = vmul.f32 1.0, %v306
    %v308 = vrcp.pop %v295
    %v309 = vmul.f32 1.0, %v308
    %v310 = vrcp.pop %v296
    %v311 = vmul.f32 1.0, %v310
    %v312 = vrcp.pop %v297
    %v313 = vmul.f32 1.0, %v312
    %v314 = vld [vmem:[%s5] sm:$0xff]
    %v315 = vld [vmem:[%s5 + $0x8] sm:$0xff]
    %v316 = vld [vmem:[%s5 + $0x10] sm:$0xff]
    %v317 = vld [vmem:[%s5 + $0x18] sm:$0xff]
    %v318 = vld [vmem:[%s5 + $0x20] sm:$0xff]
    %v319 = vld [vmem:[%s5 + $0x28] sm:$0xff]
    %v320 = vld [vmem:[%s5 + $0x30] sm:$0xff]
    %v321 = vld [vmem:[%s5 + $0x38] sm:$0xff]
    %323 = vset.pattern.permute.xlu0 0
    %324 = vperm.xlu0 %323, %v299
    %v325 = vpop.permute.xlu0 %324
    %328 = vset.pattern.permute.xlu0 0
    %329 = vperm.xlu0 %328, %v301
    %v330 = vpop.permute.xlu0 %329
    %333 = vset.pattern.permute.xlu0 0
    %334 = vperm.xlu0 %333, %v303
    %v335 = vpop.permute.xlu0 %334
    %338 = vset.pattern.permute.xlu0 0
    %339 = vperm.xlu0 %338, %v305
    %v340 = vpop.permute.xlu0 %339
    %343 = vset.pattern.permute.xlu0 0
    %344 = vperm.xlu0 %343, %v307
    %v345 = vpop.permute.xlu0 %344
    %348 = vset.pattern.permute.xlu0 0
    %349 = vperm.xlu0 %348, %v309
    %v350 = vpop.permute.xlu0 %349
    %353 = vset.pattern.permute.xlu0 0
    %354 = vperm.xlu0 %353, %v311
    %v355 = vpop.permute.xlu0 %354
    %358 = vset.pattern.permute.xlu0 0
    %359 = vperm.xlu0 %358, %v313
    %v360 = vpop.permute.xlu0 %359
    %v362 = vmul.f32 %v325, %v314
    %v363 = vmul.f32 %v330, %v315
    %v364 = vmul.f32 %v335, %v316
    %v365 = vmul.f32 %v340, %v317
    %v366 = vmul.f32 %v345, %v318
    %v367 = vmul.f32 %v350, %v319
    %v368 = vmul.f32 %v355, %v320
    %v369 = vmul.f32 %v360, %v321
    %370 = vst.msk [vmem:[#allocation2] sm:$0xff] %vm36, %v362
    %371 = vst.msk [vmem:[#allocation2 + $0x8] sm:$0xff] %vm36, %v363
    %372 = vst.msk [vmem:[#allocation2 + $0x10] sm:$0xff] %vm36, %v364
    %373 = vst.msk [vmem:[#allocation2 + $0x18] sm:$0xff] %vm36, %v365
    %374 = vst.msk [vmem:[#allocation2 + $0x20] sm:$0xff] %vm36, %v366
    %375 = vst.msk [vmem:[#allocation2 + $0x28] sm:$0xff] %vm36, %v367
    %376 = vst.msk [vmem:[#allocation2 + $0x30] sm:$0xff] %vm36, %v368
    %377 = vst.msk [vmem:[#allocation2 + $0x38] sm:$0xff] %vm36, %v369
    // Predicated region
    $region26: #{tpu_custom_call.1} parent=1 // pred_check
      _
    $region27: #{tpu_custom_call.1} parent=1 // pred_check_branch
      %379 = sbr.rel (0) target = $region29
    $region28: #{tpu_custom_call.1} parent=1 // pred_region
      %s381 = ssub.s32 1024, 1024
      %382 = vsyncadd [#allocation3], %s381
      %s383 = sshll.u32 [#allocation2], 4
      %s384 = int_to_ptr.vmem [resolvable:$true] %s383
      %389 = dma.vmem_to_hbm [thread:$0]  %s384, 1024, %s6, [#allocation3], 128, 128, 8
    $region29: #{tpu_custom_call.1} parent=1 // pred_fallthru
      _
    // Predicated region
    $region30: #{tpu_custom_call.1} parent=1 // pred_check
      _
    $region31: #{tpu_custom_call.1} parent=1 // pred_check_branch
      %391 = sbr.rel (0) target = $region33
    $region32: #{tpu_custom_call.1} parent=1 // pred_region
      %392 = dma.done [#allocation3], 1024
    $region33: #{tpu_custom_call.1} parent=1 // pred_fallthru
      _
    %393 = vsyncpa [#allocation3], 1

</llo_original>
